<compile_context>
chip_gen: v6e
topology: v6e:2x2x1
jax: 0.10.0
libtpu: 0.0.40
codegen_flags: <defaults>
</compile_context>

<pallas_src>
import numpy as np
import jax
import jax.numpy as jnp
from jax.experimental import pallas as pl
from jax.experimental.pallas import tpu as pltpu


# -----------------------------------------------------------------------------
# Offline folding: [nearest upsample -> ConvTranspose2d(stride=1)] as a dense matrix
# -----------------------------------------------------------------------------
def _build_convt_layer_matrix(wt, bias, in_hw, target_hw, k):
    """Dense matrix for one decoder CNN layer.

    Maps a flattened (Cin, Hin, Win) input (row-major, the torch .view order) to the
    flattened (Cout, Ho, Wo) output of:
        nearest-interpolate to target_hw (PyTorch rule: src = floor(dst*in/out))
        -> ConvTranspose2d(stride=1) scatter-add with kernel `wt` (Cin, Cout, k, k).
    Returns (M, bias_flat) with M: (Cin*Hin*Win, Cout*Ho*Wo).
    """
    cin, cout = wt.shape[0], wt.shape[1]
    hin, win = in_hw
    hup, wup = target_hw
    ho, wo = hup + k - 1, wup + k - 1
    ih = (np.arange(hup) * hin) // hup
    iw = (np.arange(wup) * win) // wup

    M = np.zeros((cin, hin, win, cout, ho, wo), dtype=np.float64)
    for hd in range(hup):
        hs = int(ih[hd])
        for wd in range(wup):
            ws = int(iw[wd])
            for kh in range(k):
                for kw in range(k):
                    M[:, hs, ws, :, hd + kh, wd + kw] += wt[:, :, kh, kw]
    M = M.reshape(cin * hin * win, cout * ho * wo)
    b_flat = np.broadcast_to(np.asarray(bias, np.float64)[:, None, None],
                             (cout, ho, wo)).reshape(-1)
    return M, b_flat


def fold_decoder_params(params, cnn_out_shape, pooled_sizes, k):
    """Fold the decoder into matmul-ready tiles:
       - per conv layer: dense (in_flat, out_flat) matrix + flat bias;
       - the last MLP Linear (no nonlinearity after it) fused into conv layer 0."""
    c0, f0, t0 = cnn_out_shape
    mlp = params["mlp"]
    convt = params["convt"]
    n_conv = len(convt)

    layer_mats, layer_biases = [], []
    in_hw = (f0, t0)
    for li, (wt, b) in enumerate(convt):
        target = pooled_sizes[n_conv - 1 - li]        # pooled_correction[layers_num-1]
        M, bflat = _build_convt_layer_matrix(np.asarray(wt, np.float64),
                                             np.asarray(b, np.float64),
                                             in_hw, target, k)
        layer_mats.append(M)
        layer_biases.append(bflat)
        in_hw = (target[0] + k - 1, target[1] + k - 1)

    # Fuse last MLP Linear (h @ W + b, no nonlinearity) with conv layer 0's map:
    #   (h @ W + b) @ M0 + b0  ==  h @ (W @ M0) + (b @ M0 + b0)
    w_last = np.asarray(mlp[-1][0], np.float64)
    b_last = np.asarray(mlp[-1][1], np.float64)
    W0 = w_last @ layer_mats[0]
    b0 = b_last @ layer_mats[0] + layer_biases[0]

    kept_mlp = [(jnp.asarray(w, jnp.float32),
                 jnp.asarray(np.asarray(b).reshape(1, -1), jnp.float32))
                for (w, b) in mlp[:-1]]

    fused = [(jnp.asarray(W0, jnp.float32), jnp.asarray(b0.reshape(1, -1), jnp.float32))]
    for li in range(1, n_conv):
        fused.append((jnp.asarray(layer_mats[li], jnp.float32),
                      jnp.asarray(layer_biases[li].reshape(1, -1), jnp.float32)))
    return kept_mlp, fused


# -----------------------------------------------------------------------------
# Fused decoder kernel: relu-matmul chain ending in a lane-dense sigmoid matmul
# -----------------------------------------------------------------------------
def make_decoder_kernel(n_pre, n_fused):
    def kernel(*refs):
        z_ref = refs[0]
        o_ref = refs[-1]
        idx = 1

        h = z_ref[...]
        # DecoderMLP layers that keep their ReLU (the last Linear is fused below).
        for _ in range(n_pre):
            w = refs[idx][...]
            b = refs[idx + 1][...]
            idx += 2
            h = jnp.maximum(jnp.dot(h, w, preferred_element_type=jnp.float32) + b, 0.0)

        # Folded [Interpolate -> ConvTranspose2d] layers (layer 0 also contains the
        # last MLP Linear): ReLU in between, Sigmoid on the last.
        for li in range(n_fused):
            w = refs[idx][...]
            b = refs[idx + 1][...]
            idx += 2
            h = jnp.dot(h, w, preferred_element_type=jnp.float32) + b
            if li != n_fused - 1:
                h = jnp.maximum(h, 0.0)                 # ReLU
            else:
                h = 0.5 * jnp.tanh(0.5 * h) + 0.5       # exact sigmoid, single EUP op

        o_ref[...] = h.astype(o_ref.dtype)              # lane-dense (B, H*W) store

    return kernel


# -----------------------------------------------------------------------------
# Wrapper: single grid=() pallas_call, everything in VMEM
# -----------------------------------------------------------------------------
def aecnn_dec_forward(z, params, cnn_out_shape, pooled_sizes, k):
    batch = z.shape[0]
    kept_mlp, fused = fold_decoder_params(params, cnn_out_shape, pooled_sizes, k)

    out_h = pooled_sizes[0][0] + k - 1                  # final layer Cout == 1
    out_w = pooled_sizes[0][1] + k - 1
    out_flat = out_h * out_w

    args = [z.astype(jnp.float32)]
    for w, b in kept_mlp:
        args += [w, b]
    for w, b in fused:
        args += [w, b]

    kernel = make_decoder_kernel(len(kept_mlp), len(fused))
    vmem = pl.BlockSpec(memory_space=pltpu.MemorySpace.VMEM)
    out2d = pl.pallas_call(
        kernel,
        out_shape=jax.ShapeDtypeStruct((batch, out_flat), jnp.float32),
        in_specs=[vmem] * len(args),
        out_specs=vmem,
    )(*args)
    # (B, H*W) -> (B, D, T) == predicted_out.squeeze(dim=1); reshape outside the kernel
    # so the in-kernel store stays unmasked / lane-dense.
    return out2d.reshape(batch, out_h, out_w)


# -----------------------------------------------------------------------------
# Deterministic parameter construction (geometry matches the paired encoder)
# -----------------------------------------------------------------------------
def init_params(key, freqlen, seqlen, hidden_size, hidden_units, kernelsize,
                poolingsize, convchannels):
    chans = [1] + convchannels
    fsize, tsize = freqlen, seqlen
    pooled_correction = []                      # conv outputs BEFORE pooling (encoder)
    for _ in range(len(chans) - 1):
        fsize, tsize = fsize - kernelsize + 1, tsize - kernelsize + 1
        pooled_correction.append((fsize, tsize))
        fsize = (fsize - poolingsize) // poolingsize + 1
        tsize = (tsize - poolingsize) // poolingsize + 1
    cnn_out_shape = (chans[-1], fsize, tsize)   # CnnOutputShape[0]
    lsize = chans[-1] * fsize * tsize

    # DecoderMLP: hidden_size -> hidden_units[::-1] -> lsize
    units = list(hidden_units[::-1]) + [lsize]
    mlp = []
    in_dim = hidden_size
    for u in units:
        key, kw_, kb_ = jax.random.split(key, 3)
        mlp.append((0.1 * jax.random.normal(kw_, (in_dim, u), jnp.float32),
                    0.1 * jax.random.normal(kb_, (u,), jnp.float32)))
        in_dim = u

    # DecoderCNN: ConvTranspose2d weights in PyTorch layout (Cin, Cout, k, k),
    # in decode order (deepest layer first).
    convt = []
    for i in range(len(chans) - 1, 0, -1):
        key, kw_, kb_ = jax.random.split(key, 3)
        cin, cout = chans[i], chans[i - 1]
        convt.append((0.1 * jax.random.normal(kw_, (cin, cout, kernelsize, kernelsize),
                                              jnp.float32),
                      0.1 * jax.random.normal(kb_, (cout,), jnp.float32)))
    return {"mlp": mlp, "convt": convt}, cnn_out_shape, pooled_correction


# -----------------------------------------------------------------------------
# Pure-JAX reference (definitional: scatter-add ConvTranspose, PyTorch nearest)
# -----------------------------------------------------------------------------
def reference_forward(z, params, cnn_out_shape, pooled_sizes, k):
    h = z.astype(jnp.float32)
    mlp = params["mlp"]
    for i, (w, b) in enumerate(mlp):
        h = h @ w + b
        if i != len(mlp) - 1:
            h = jnp.maximum(h, 0.0)
    batch = z.shape[0]
    h = h.reshape(batch, *cnn_out_shape)                 # torch .view(-1, *CnnOutputShape)
    convs = params["convt"]
    n = len(convs)
    for li, (wt, b) in enumerate(convs):
        tgt = pooled_sizes[n - 1 - li]
        hin, win = h.shape[2], h.shape[3]
        ih = (np.arange(tgt[0]) * hin) // tgt[0]         # PyTorch 'nearest' rule
        iw = (np.arange(tgt[1]) * win) // tgt[1]
        h = h[:, :, ih][:, :, :, iw]
        cout = wt.shape[1]
        ho, wo = h.shape[2] + k - 1, h.shape[3] + k - 1
        out = jnp.zeros((batch, cout, ho, wo), jnp.float32)
        for kh in range(k):                               # direct ConvTranspose def
            for kw in range(k):
                contrib = jnp.einsum('bihw,io->bohw', h, wt[:, :, kh, kw])
                out = out.at[:, :, kh:kh + h.shape[2], kw:kw + h.shape[3]].add(contrib)
        out = out + b[None, :, None, None]
        h = jnp.maximum(out, 0.0) if li != n - 1 else 1.0 / (1.0 + jnp.exp(-out))
    return h[:, 0]                                        # squeeze(dim=1)


if __name__ == "__main__":
    B = 2
    freqlen = seqlen = 16
    hidden_size, hidden_units = 8, [32]
    ksize, psize = 3, 2
    convchannels = [4, 8]

    key = jax.random.PRNGKey(0)
    kz, kp = jax.random.split(key)
    params, cnn_out_shape, pooled_sizes = init_params(
        kp, freqlen, seqlen, hidden_size, hidden_units, ksize, psize, convchannels)
    z = jax.random.normal(kz, (B, hidden_size), jnp.float32)     # latent code [B x H]

    out = aecnn_dec_forward(z, params, cnn_out_shape, pooled_sizes, ksize)
    out = jax.block_until_ready(out)

    ref = reference_forward(z, params, cnn_out_shape, pooled_sizes, ksize)
    assert out.shape == (B, freqlen, seqlen), out.shape
    np.testing.assert_allclose(np.asarray(out), np.asarray(ref), rtol=1e-4, atol=1e-4)
    print("KERNEL_OK")
</pallas_src>

<mosaic_0001>
module attributes {stable_mosaic.version = 11 : i64} {
  func.func @kernel(%arg0: memref<2x8xf32, #tpu.memory_space<vmem>>, %arg1: memref<8x32xf32, #tpu.memory_space<vmem>>, %arg2: memref<1x32xf32, #tpu.memory_space<vmem>>, %arg3: memref<32x196xf32, #tpu.memory_space<vmem>>, %arg4: memref<1x196xf32, #tpu.memory_space<vmem>>, %arg5: memref<196x256xf32, #tpu.memory_space<vmem>>, %arg6: memref<1x256xf32, #tpu.memory_space<vmem>>, %arg7: memref<2x256xf32, #tpu.memory_space<vmem>>) attributes {dimension_semantics = [], scalar_prefetch = 0 : i64, scratch_operands = 0 : i64, tpu.core_type = #tpu.core_type<tc>} {
    %c0 = arith.constant 0 : index
    %c0_0 = arith.constant 0 : index
    %0 = vector.load %arg0[%c0, %c0_0] : memref<2x8xf32, #tpu.memory_space<vmem>>, vector<2x8xf32>
    %c0_1 = arith.constant 0 : index
    %c0_2 = arith.constant 0 : index
    %1 = vector.load %arg1[%c0_1, %c0_2] : memref<8x32xf32, #tpu.memory_space<vmem>>, vector<8x32xf32>
    %c0_3 = arith.constant 0 : index
    %c0_4 = arith.constant 0 : index
    %2 = vector.load %arg2[%c0_3, %c0_4] : memref<1x32xf32, #tpu.memory_space<vmem>>, vector<1x32xf32>
    %cst = arith.constant dense<0.000000e+00> : vector<2x32xf32>
    %3 = tpu.matmul %0, %1, %cst {dimension_numbers = #tpu.dot_dimension_numbers<[1], [0], [0], [1], [0, 0, 1, 1], [], []>} : vector<2x8xf32>, vector<8x32xf32>, vector<2x32xf32> -> vector<2x32xf32>
    %4 = vector.broadcast %2 : vector<1x32xf32> to vector<2x32xf32>
    %5 = arith.addf %3, %4 : vector<2x32xf32>
    %cst_5 = arith.constant 0.000000e+00 : f32
    %6 = vector.broadcast %cst_5 : f32 to vector<2x32xf32>
    %7 = arith.maximumf %5, %6 : vector<2x32xf32>
    %c0_6 = arith.constant 0 : index
    %c0_7 = arith.constant 0 : index
    %8 = vector.load %arg3[%c0_6, %c0_7] : memref<32x196xf32, #tpu.memory_space<vmem>>, vector<32x196xf32>
    %c0_8 = arith.constant 0 : index
    %c0_9 = arith.constant 0 : index
    %9 = vector.load %arg4[%c0_8, %c0_9] : memref<1x196xf32, #tpu.memory_space<vmem>>, vector<1x196xf32>
    %cst_10 = arith.constant dense<0.000000e+00> : vector<2x196xf32>
    %10 = tpu.matmul %7, %8, %cst_10 {dimension_numbers = #tpu.dot_dimension_numbers<[1], [0], [0], [1], [0, 0, 1, 1], [], []>} : vector<2x32xf32>, vector<32x196xf32>, vector<2x196xf32> -> vector<2x196xf32>
    %11 = vector.broadcast %9 : vector<1x196xf32> to vector<2x196xf32>
    %12 = arith.addf %10, %11 : vector<2x196xf32>
    %cst_11 = arith.constant 0.000000e+00 : f32
    %13 = vector.broadcast %cst_11 : f32 to vector<2x196xf32>
    %14 = arith.maximumf %12, %13 : vector<2x196xf32>
    %c0_12 = arith.constant 0 : index
    %c0_13 = arith.constant 0 : index
    %15 = vector.load %arg5[%c0_12, %c0_13] : memref<196x256xf32, #tpu.memory_space<vmem>>, vector<196x256xf32>
    %c0_14 = arith.constant 0 : index
    %c0_15 = arith.constant 0 : index
    %16 = vector.load %arg6[%c0_14, %c0_15] : memref<1x256xf32, #tpu.memory_space<vmem>>, vector<1x256xf32>
    %cst_16 = arith.constant dense<0.000000e+00> : vector<2x256xf32>
    %17 = tpu.matmul %14, %15, %cst_16 {dimension_numbers = #tpu.dot_dimension_numbers<[1], [0], [0], [1], [0, 0, 1, 1], [], []>} : vector<2x196xf32>, vector<196x256xf32>, vector<2x256xf32> -> vector<2x256xf32>
    %18 = vector.broadcast %16 : vector<1x256xf32> to vector<2x256xf32>
    %19 = arith.addf %17, %18 : vector<2x256xf32>
    %cst_17 = arith.constant 5.000000e-01 : f32
    %20 = vector.broadcast %cst_17 : f32 to vector<2x256xf32>
    %21 = arith.mulf %20, %19 : vector<2x256xf32>
    %22 = math.tanh %21 : vector<2x256xf32>
    %cst_18 = arith.constant 5.000000e-01 : f32
    %23 = vector.broadcast %cst_18 : f32 to vector<2x256xf32>
    %24 = arith.mulf %23, %22 : vector<2x256xf32>
    %cst_19 = arith.constant 5.000000e-01 : f32
    %25 = vector.broadcast %cst_19 : f32 to vector<2x256xf32>
    %26 = arith.addf %24, %25 : vector<2x256xf32>
    %c0_20 = arith.constant 0 : index
    %c0_21 = arith.constant 0 : index
    %27 = vector.load %arg7[%c0_20, %c0_21] : memref<2x256xf32, #tpu.memory_space<vmem>>, vector<2x256xf32>
    tpu.vector_store %arg7[%c0_20, %c0_21], %26 {strides = array<i32>} : memref<2x256xf32, #tpu.memory_space<vmem>>, vector<2x256xf32>,
    return
  }
}

</mosaic_0001>

<llo_original>
// kernel: tpu_custom_call.1
$region0: #{tpu_custom_call.1}
  #allocation0 [shape = 'u32[]', space=smem, size = 0x4, offset = 0x4, fixed_abs, tag = 'smem constant byte address 0x4 - core index']
  #allocation1 [shape = 'u32[144,128]{1,0:T(1,128)}', space=vmem, size = 0x12000, scoped, tag = 'internal scratch']
  %s0 = inlined_call_operand.hbm [shape: f32[2,8], index: 0, kind: input, shape index: {}]
  %s1 = inlined_call_operand.hbm [shape: f32[8,32], index: 1, kind: input, shape index: {}]
  %s2 = inlined_call_operand.vmem [shape: f32[1,32], index: 2, kind: input, shape index: {}]
  %s3 = inlined_call_operand.hbm [shape: f32[32,196], index: 3, kind: input, shape index: {}]
  %s4 = inlined_call_operand.vmem [shape: f32[1,196], index: 4, kind: input, shape index: {}]
  %s5 = inlined_call_operand.hbm [shape: f32[196,256], index: 5, kind: input, shape index: {}]
  %s6 = inlined_call_operand.vmem [shape: f32[1,256], index: 6, kind: input, shape index: {}]
  %s7 = inlined_call_operand.hbm [shape: f32[2,256], index: 7, kind: output, shape index: {}]
  %s8 = sld [smem:[#allocation0]]
  $region54: #{tpu_custom_call.1} parent=0
    _
  %s10 = ssub.s32 1, %s8
  %s11 = scalar_select 0, %s10, %s8
  $region1: #{tpu_custom_call.1} parent=0
    #allocation2 [shape = 'u8[1024]{0}', space=vmem, size = 0x400, scoped, tag = 'input window, operand 0, single buffered']
    #allocation3 [shape = 's32[1]{0}', space=sflag, size = 0x4, scoped, tag = 'scoped memory for tpu_custom_call.1']
    #allocation4 [shape = 's32[1]{0}', space=sflag, size = 0x4, scoped, tag = 'scoped memory for tpu_custom_call.1']
    #allocation5 [shape = 'u8[4096]{0}', space=vmem, size = 0x1000, scoped, tag = 'input window, operand 1, single buffered']
    #allocation6 [shape = 's32[1]{0}', space=sflag, size = 0x4, scoped, tag = 'scoped memory for tpu_custom_call.1']
    #allocation7 [shape = 'u8[32768]{0}', space=vmem, size = 0x8000, scoped, tag = 'input window, operand 3, single buffered']
    #allocation8 [shape = 'u8[204800]{0}', space=vmem, size = 0x32000, scoped, tag = 'input window, operand 5, single buffered']
    #allocation9 [shape = 's32[1]{0}', space=sflag, size = 0x4, scoped, tag = 'scoped memory for tpu_custom_call.1']
    #allocation10 [shape = 'u8[2048]{0}', space=vmem, size = 0x800, scoped, tag = 'output window, operand 0, single buffered']
    %12 = vsyncpa [#allocation3], 0
    %13 = vsyncpa [#allocation6], 0
    %14 = vsyncpa [#allocation9], 0
    %15 = vsyncpa [#allocation4], 0
    // Predicated region
    $region2: #{tpu_custom_call.1} parent=1 // pred_check
      _
    $region3: #{tpu_custom_call.1} parent=1 // pred_check_branch
      %17 = sbr.rel (0) target = $region5
    $region4: #{tpu_custom_call.1} parent=1 // pred_region
      %s19 = ssub.s32 32, 32
      %20 = vsyncadd [#allocation3], %s19
      %s22 = sshll.u32 [#allocation2], 4
      %s23 = int_to_ptr.vmem [resolvable:$true] %s22
      %25 = dma.hbm_to_vmem [thread:$0]  %s0, 32, %s23, [#allocation3]
    $region5: #{tpu_custom_call.1} parent=1 // pred_fallthru
      _
    // Predicated region
    $region6: #{tpu_custom_call.1} parent=1 // pred_check
      _
    $region7: #{tpu_custom_call.1} parent=1 // pred_check_branch
      %27 = sbr.rel (0) target = $region9
    $region8: #{tpu_custom_call.1} parent=1 // pred_region
      %s29 = ssub.s32 128, 128
      %30 = vsyncadd [#allocation6], %s29
      %s32 = sshll.u32 [#allocation5], 4
      %s33 = int_to_ptr.vmem [resolvable:$true] %s32
      %35 = dma.hbm_to_vmem [thread:$0]  %s1, 128, %s33, [#allocation6]
    $region9: #{tpu_custom_call.1} parent=1 // pred_fallthru
      _
    // Predicated region
    $region10: #{tpu_custom_call.1} parent=1 // pred_check
      _
    $region11: #{tpu_custom_call.1} parent=1 // pred_check_branch
      %37 = sbr.rel (0) target = $region13
    $region12: #{tpu_custom_call.1} parent=1 // pred_region
      _
    $region13: #{tpu_custom_call.1} parent=1 // pred_fallthru
      _
    // Predicated region
    $region14: #{tpu_custom_call.1} parent=1 // pred_check
      _
    $region15: #{tpu_custom_call.1} parent=1 // pred_check_branch
      %39 = sbr.rel (0) target = $region17
    $region16: #{tpu_custom_call.1} parent=1 // pred_region
      %s41 = ssub.s32 1024, 1024
      %42 = vsyncadd [#allocation6], %s41
      %s43 = sshll.u32 [#allocation7], 4
      %s44 = int_to_ptr.vmem [resolvable:$true] %s43
      %49 = dma.hbm_to_vmem [thread:$0]  %s3, 1024, %s44, [#allocation6], 256, 256, 16
    $region17: #{tpu_custom_call.1} parent=1 // pred_fallthru
      _
    // Predicated region
    $region18: #{tpu_custom_call.1} parent=1 // pred_check
      _
    $region19: #{tpu_custom_call.1} parent=1 // pred_check_branch
      %51 = sbr.rel (0) target = $region21
    $region20: #{tpu_custom_call.1} parent=1 // pred_region
      _
    $region21: #{tpu_custom_call.1} parent=1 // pred_fallthru
      _
    // Predicated region
    $region22: #{tpu_custom_call.1} parent=1 // pred_check
      _
    $region23: #{tpu_custom_call.1} parent=1 // pred_check_branch
      %53 = sbr.rel (0) target = $region25
    $region24: #{tpu_custom_call.1} parent=1 // pred_region
      %s55 = ssub.s32 6400, 6400
      %56 = vsyncadd [#allocation9], %s55
      %s57 = sshll.u32 [#allocation8], 4
      %s58 = int_to_ptr.vmem [resolvable:$true] %s57
      %63 = dma.hbm_to_vmem [thread:$0]  %s5, 6400, %s58, [#allocation9], 256, 256, 16
    $region25: #{tpu_custom_call.1} parent=1 // pred_fallthru
      _
    // Predicated region
    $region26: #{tpu_custom_call.1} parent=1 // pred_check
      _
    $region27: #{tpu_custom_call.1} parent=1 // pred_check_branch
      %65 = sbr.rel (0) target = $region29
    $region28: #{tpu_custom_call.1} parent=1 // pred_region
      _
    $region29: #{tpu_custom_call.1} parent=1 // pred_fallthru
      _
    // Predicated region
    $region30: #{tpu_custom_call.1} parent=1 // pred_check
      _
    $region31: #{tpu_custom_call.1} parent=1 // pred_check_branch
      %67 = sbr.rel (0) target = $region33
    $region32: #{tpu_custom_call.1} parent=1 // pred_region
      %68 = dma.done [#allocation3], 32
    $region33: #{tpu_custom_call.1} parent=1 // pred_fallthru
      _
    // Predicated region
    $region34: #{tpu_custom_call.1} parent=1 // pred_check
      _
    $region35: #{tpu_custom_call.1} parent=1 // pred_check_branch
      %70 = sbr.rel (0) target = $region37
    $region36: #{tpu_custom_call.1} parent=1 // pred_region
      %71 = dma.done [#allocation6], 128
    $region37: #{tpu_custom_call.1} parent=1 // pred_fallthru
      _
    // Predicated region
    $region38: #{tpu_custom_call.1} parent=1 // pred_check
      _
    $region39: #{tpu_custom_call.1} parent=1 // pred_check_branch
      %73 = sbr.rel (0) target = $region41
    $region40: #{tpu_custom_call.1} parent=1 // pred_region
      %74 = dma.done [#allocation6], 1024
    $region41: #{tpu_custom_call.1} parent=1 // pred_fallthru
      _
    // Predicated region
    $region42: #{tpu_custom_call.1} parent=1 // pred_check
      _
    $region43: #{tpu_custom_call.1} parent=1 // pred_check_branch
      %76 = sbr.rel (0) target = $region45
    $region44: #{tpu_custom_call.1} parent=1 // pred_region
      %77 = dma.done [#allocation9], 6400
    $region45: #{tpu_custom_call.1} parent=1 // pred_fallthru
      _
    %v78 = vld [vmem:[#allocation2] sm:$0x3]
    %v79 = vld [vmem:[#allocation5] sm:$0xff]
    %v80 = vld [vmem:[%s2] sm:$0x1]
    %v82 = vlaneseq
    %v83 = vshrl.u32 %v82, 7
    %v84 = vsub.s32 0, %v83
    %v85 = vrot.slane %v80, %v84
    %vm87 = vcmask 64512
    %v89 = vsel %vm87, %v78, 0
    %91 = vmatprep.subr.mxu0 0.0
    %92 = vmatpush1.msra.mxu0 0.0
    %93 = vmatprep.subr.mxu0 0.0
    %94 = vmatpush1.msra.mxu0 0.0
    %95 = vmatprep.subr.mxu0 0.0
    %96 = vmatpush1.msra.mxu0 0.0
    %97 = vmatprep.subr.mxu0 0.0
    %98 = vmatpush1.msra.mxu0 0.0
    %99 = vmatprep.subr.mxu0 0.0
    %100 = vmatpush1.msra.mxu0 0.0
    %101 = vmatprep.subr.mxu0 0.0
    %102 = vmatpush1.msra.mxu0 0.0
    %103 = vmatprep.subr.mxu0 0.0
    %104 = vmatpush1.msra.mxu0 0.0
    %105 = vmatprep.subr.mxu0 0.0
    %106 = vmatpush1.msra.mxu0 0.0
    %107 = vmatprep.subr.mxu0 0.0
    %108 = vmatpush1.msra.mxu0 0.0
    %109 = vmatprep.subr.mxu0 0.0
    %110 = vmatpush1.msra.mxu0 0.0
    %111 = vmatprep.subr.mxu0 0.0
    %112 = vmatpush1.msra.mxu0 0.0
    %113 = vmatprep.subr.mxu0 0.0
    %114 = vmatpush1.msra.mxu0 0.0
    %115 = vmatprep.subr.mxu0 0.0
    %116 = vmatpush1.msra.mxu0 0.0
    %117 = vmatprep.subr.mxu0 0.0
    %118 = vmatpush1.msra.mxu0 0.0
    %119 = vmatprep.subr.mxu0 0.0
    %120 = vmatpush1.msra.mxu0 0.0
    %121 = vmatprep.subr.mxu0 0.0
    %122 = vmatpush1.msra.mxu0 %v79
    %123 = vmatprep.subr.mxu0 0.0
    %124 = vmatpush2.msra.mxu0 0.0
    %125 = vmatprep.subr.mxu0 0.0
    %126 = vmatpush2.msra.mxu0 0.0
    %127 = vmatprep.subr.mxu0 0.0
    %128 = vmatpush2.msra.mxu0 0.0
    %129 = vmatprep.subr.mxu0 0.0
    %130 = vmatpush2.msra.mxu0 0.0
    %131 = vmatprep.subr.mxu0 0.0
    %132 = vmatpush2.msra.mxu0 0.0
    %133 = vmatprep.subr.mxu0 0.0
    %134 = vmatpush2.msra.mxu0 0.0
    %135 = vmatprep.subr.mxu0 0.0
    %136 = vmatpush2.msra.mxu0 0.0
    %137 = vmatprep.subr.mxu0 0.0
    %138 = vmatpush2.msra.mxu0 0.0
    %139 = vmatprep.subr.mxu0 0.0
    %140 = vmatpush2.msra.mxu0 0.0
    %141 = vmatprep.subr.mxu0 0.0
    %142 = vmatpush2.msra.mxu0 0.0
    %143 = vmatprep.subr.mxu0 0.0
    %144 = vmatpush2.msra.mxu0 0.0
    %145 = vmatprep.subr.mxu0 0.0
    %146 = vmatpush2.msra.mxu0 0.0
    %147 = vmatprep.subr.mxu0 0.0
    %148 = vmatpush2.msra.mxu0 0.0
    %149 = vmatprep.subr.mxu0 0.0
    %150 = vmatpush2.msra.mxu0 0.0
    %151 = vmatprep.subr.mxu0 0.0
    %152 = vmatpush2.msra.mxu0 0.0
    %153 = vmatprep.subr.mxu0 0.0
    %154 = vmatpush2.msra.mxu0 0.0
    %155 = vmatprep.mubr.f32.mxu0 0.0
    %156 = vmatmul.mubr.f32.gmra.mxu0 %v89
    %v157 = vpop.f32.mrf.mxu0
    %v158 = vadd.f32 %v85, %v157
    %v159 = vpop.f32.mrf.mxu0
    %160 = vdwg.mxu0
    %v161 = vmax.f32 %v158, 0.0
    %v162 = vld [vmem:[#allocation7] sm:$0xff]
    %v163 = vld [vmem:[#allocation7 + $0x8] sm:$0xff]
    %v164 = vld [vmem:[#allocation7 + $0x10] sm:$0xff]
    %v165 = vld [vmem:[#allocation7 + $0x18] sm:$0xff]
    %v166 = vld [vmem:[#allocation7 + $0x20] sm:$0xff]
    %v167 = vld [vmem:[#allocation7 + $0x28] sm:$0xff]
    %v168 = vld [vmem:[#allocation7 + $0x30] sm:$0xff]
    %v169 = vld [vmem:[#allocation7 + $0x38] sm:$0xff]
    %v170 = vld [vmem:[%s4] sm:$0x3]
    %v172 = vlaneseq
    %v173 = vshrl.u32 %v172, 7
    %v174 = vsub.s32 0, %v173
    %v175 = vrot.slane %v170, %v174
    %v176 = vlaneseq
    %v177 = vshrl.u32 %v176, 7
    %v178 = vsub.s32 1, %v177
    %v179 = vrot.slane %v170, %v178
    %vm182 = vcmask 261120
    %v184 = vsel %vm182, %v161, 0
    %186 = vmatprep.subr.mxu0 0.0
    %187 = vmatpush1.msra.mxu0 0.0
    %188 = vmatprep.subr.mxu0 0.0
    %189 = vmatpush1.msra.mxu0 0.0
    %190 = vmatprep.subr.mxu0 0.0
    %191 = vmatpush1.msra.mxu0 0.0
    %192 = vmatprep.subr.mxu0 0.0
    %193 = vmatpush1.msra.mxu0 0.0
    %194 = vmatprep.subr.mxu0 0.0
    %195 = vmatpush1.msra.mxu0 0.0
    %196 = vmatprep.subr.mxu0 0.0
    %197 = vmatpush1.msra.mxu0 0.0
    %198 = vmatprep.subr.mxu0 0.0
    %199 = vmatpush1.msra.mxu0 0.0
    %200 = vmatprep.subr.mxu0 0.0
    %201 = vmatpush1.msra.mxu0 0.0
    %202 = vmatprep.subr.mxu0 0.0
    %203 = vmatpush1.msra.mxu0 0.0
    %204 = vmatprep.subr.mxu0 0.0
    %205 = vmatpush1.msra.mxu0 0.0
    %206 = vmatprep.subr.mxu0 0.0
    %207 = vmatpush1.msra.mxu0 0.0
    %208 = vmatprep.subr.mxu0 0.0
    %209 = vmatpush1.msra.mxu0 0.0
    %210 = vmatprep.subr.mxu0 %v169
    %211 = vmatpush1.msra.mxu0 %v168
    %212 = vmatprep.subr.mxu0 %v167
    %213 = vmatpush1.msra.mxu0 %v166
    %214 = vmatprep.subr.mxu0 %v165
    %215 = vmatpush1.msra.mxu0 %v164
    %216 = vmatprep.subr.mxu0 %v163
    %217 = vmatpush1.msra.mxu0 %v162
    %218 = vmatprep.subr.mxu0 0.0
    %219 = vmatpush2.msra.mxu0 0.0
    %220 = vmatprep.subr.mxu0 0.0
    %221 = vmatpush2.msra.mxu0 0.0
    %222 = vmatprep.subr.mxu0 0.0
    %223 = vmatpush2.msra.mxu0 0.0
    %224 = vmatprep.subr.mxu0 0.0
    %225 = vmatpush2.msra.mxu0 0.0
    %226 = vmatprep.subr.mxu0 0.0
    %227 = vmatpush2.msra.mxu0 0.0
    %228 = vmatprep.subr.mxu0 0.0
    %229 = vmatpush2.msra.mxu0 0.0
    %230 = vmatprep.subr.mxu0 0.0
    %231 = vmatpush2.msra.mxu0 0.0
    %232 = vmatprep.subr.mxu0 0.0
    %233 = vmatpush2.msra.mxu0 0.0
    %234 = vmatprep.subr.mxu0 0.0
    %235 = vmatpush2.msra.mxu0 0.0
    %236 = vmatprep.subr.mxu0 0.0
    %237 = vmatpush2.msra.mxu0 0.0
    %238 = vmatprep.subr.mxu0 0.0
    %239 = vmatpush2.msra.mxu0 0.0
    %240 = vmatprep.subr.mxu0 0.0
    %241 = vmatpush2.msra.mxu0 0.0
    %242 = vmatprep.subr.mxu0 0.0
    %243 = vmatpush2.msra.mxu0 0.0
    %244 = vmatprep.subr.mxu0 0.0
    %245 = vmatpush2.msra.mxu0 0.0
    %246 = vmatprep.subr.mxu0 0.0
    %247 = vmatpush2.msra.mxu0 0.0
    %248 = vmatprep.subr.mxu0 0.0
    %249 = vmatpush2.msra.mxu0 0.0
    %250 = vmatprep.mubr.f32.mxu0 0.0
    %251 = vmatmul.mubr.f32.gmra.mxu0 %v184
    %v252 = vpop.f32.mrf.mxu0
    %v253 = vadd.f32 %v175, %v252
    %v254 = vpop.f32.mrf.mxu0
    %v255 = vadd.f32 %v179, %v254
    %256 = vdwg.mxu0
    %v257 = vmax.f32 %v253, 0.0
    %v258 = vmax.f32 %v255, 0.0
    %v259 = vld [vmem:[#allocation8] sm:$0xff]
    %v260 = vld [vmem:[#allocation8 + $0x8] sm:$0xff]
    %v261 = vld [vmem:[#allocation8 + $0x10] sm:$0xff]
    %v262 = vld [vmem:[#allocation8 + $0x18] sm:$0xff]
    %v263 = vld [vmem:[#allocation8 + $0x20] sm:$0xff]
    %v264 = vld [vmem:[#allocation8 + $0x28] sm:$0xff]
    %v265 = vld [vmem:[#allocation8 + $0x30] sm:$0xff]
    %v266 = vld [vmem:[#allocation8 + $0x38] sm:$0xff]
    %v267 = vld [vmem:[#allocation8 + $0x40] sm:$0xff]
    %v268 = vld [vmem:[#allocation8 + $0x48] sm:$0xff]
    %v269 = vld [vmem:[#allocation8 + $0x50] sm:$0xff]
    %v270 = vld [vmem:[#allocation8 + $0x58] sm:$0xff]
    %v271 = vld [vmem:[#allocation8 + $0x60] sm:$0xff]
    %v272 = vld [vmem:[#allocation8 + $0x68] sm:$0xff]
    %v273 = vld [vmem:[#allocation8 + $0x70] sm:$0xff]
    %v274 = vld [vmem:[#allocation8 + $0x78] sm:$0xff]
    %v275 = vld [vmem:[#allocation8 + $0x80] sm:$0xff]
    %v276 = vld [vmem:[#allocation8 + $0x88] sm:$0xff]
    %v277 = vld [vmem:[#allocation8 + $0x90] sm:$0xff]
    %v278 = vld [vmem:[#allocation8 + $0x98] sm:$0xff]
    %v279 = vld [vmem:[#allocation8 + $0xa0] sm:$0xff]
    %v280 = vld [vmem:[#allocation8 + $0xa8] sm:$0xff]
    %v281 = vld [vmem:[#allocation8 + $0xb0] sm:$0xff]
    %v282 = vld [vmem:[#allocation8 + $0xb8] sm:$0xff]
    %v283 = vld [vmem:[#allocation8 + $0xc0] sm:$0xff]
    %v284 = vld [vmem:[#allocation8 + $0xc8] sm:$0xff]
    %v285 = vld [vmem:[#allocation8 + $0xd0] sm:$0xff]
    %v286 = vld [vmem:[#allocation8 + $0xd8] sm:$0xff]
    %v287 = vld [vmem:[#allocation8 + $0xe0] sm:$0xff]
    %v288 = vld [vmem:[#allocation8 + $0xe8] sm:$0xff]
    %v289 = vld [vmem:[#allocation8 + $0xf0] sm:$0xff]
    %v290 = vld [vmem:[#allocation8 + $0xf8] sm:$0xff]
    %v291 = vld [vmem:[#allocation8 + $0x100] sm:$0xff]
    %v292 = vld [vmem:[#allocation8 + $0x108] sm:$0xff]
    %v293 = vld [vmem:[#allocation8 + $0x110] sm:$0xff]
    %v294 = vld [vmem:[#allocation8 + $0x118] sm:$0xff]
    %v295 = vld [vmem:[#allocation8 + $0x120] sm:$0xff]
    %v296 = vld [vmem:[#allocation8 + $0x128] sm:$0xff]
    %v297 = vld [vmem:[#allocation8 + $0x130] sm:$0xff]
    %v298 = vld [vmem:[#allocation8 + $0x138] sm:$0xff]
    %v299 = vld [vmem:[#allocation8 + $0x140] sm:$0xff]
    %v300 = vld [vmem:[#allocation8 + $0x148] sm:$0xff]
    %v301 = vld [vmem:[#allocation8 + $0x150] sm:$0xff]
    %v302 = vld [vmem:[#allocation8 + $0x158] sm:$0xff]
    %v303 = vld [vmem:[#allocation8 + $0x160] sm:$0xff]
    %v304 = vld [vmem:[#allocation8 + $0x168] sm:$0xff]
    %v305 = vld [vmem:[#allocation8 + $0x170] sm:$0xff]
    %v306 = vld [vmem:[#allocation8 + $0x178] sm:$0xff]
    %v307 = vld [vmem:[#allocation8 + $0x180] sm:$0xf]
    %v308 = vld [vmem:[#allocation8 + $0x188] sm:$0xf]
    %v309 = vld [vmem:[%s6] sm:$0x3]
    %v311 = vlaneseq
    %v312 = vshrl.u32 %v311, 7
    %v313 = vsub.s32 0, %v312
    %v314 = vrot.slane %v309, %v313
    %v315 = vlaneseq
    %v316 = vshrl.u32 %v315, 7
    %v317 = vsub.s32 1, %v316
    %v318 = vrot.slane %v309, %v317
    %vm321 = vcmask 556032
    %v323 = vsel %vm321, %v258, 0
    %vm325 = vcmask 1043456
    %v327 = vsel %vm325, %v307, 0
    %v330 = vsel %vm325, %v308, 0
    %332 = vmatprep.subr.mxu0 %v290
    %333 = vmatpush1.msra.mxu0 %v289
    %334 = vmatprep.subr.mxu0 %v288
    %335 = vmatpush1.msra.mxu0 %v287
    %336 = vmatprep.subr.mxu0 %v286
    %337 = vmatpush1.msra.mxu0 %v285
    %338 = vmatprep.subr.mxu0 %v284
    %339 = vmatpush1.msra.mxu0 %v283
    %340 = vmatprep.subr.mxu0 %v282
    %341 = vmatpush1.msra.mxu0 %v281
    %342 = vmatprep.subr.mxu0 %v280
    %343 = vmatpush1.msra.mxu0 %v279
    %344 = vmatprep.subr.mxu0 %v278
    %345 = vmatpush1.msra.mxu0 %v277
    %346 = vmatprep.subr.mxu0 %v276
    %347 = vmatpush1.msra.mxu0 %v275
    %348 = vmatprep.subr.mxu0 %v274
    %349 = vmatpush1.msra.mxu0 %v273
    %350 = vmatprep.subr.mxu0 %v272
    %351 = vmatpush1.msra.mxu0 %v271
    %352 = vmatprep.subr.mxu0 %v270
    %353 = vmatpush1.msra.mxu0 %v269
    %354 = vmatprep.subr.mxu0 %v268
    %355 = vmatpush1.msra.mxu0 %v267
    %356 = vmatprep.subr.mxu0 %v266
    %357 = vmatpush1.msra.mxu0 %v265
    %358 = vmatprep.subr.mxu0 %v264
    %359 = vmatpush1.msra.mxu0 %v263
    %360 = vmatprep.subr.mxu0 %v262
    %361 = vmatpush1.msra.mxu0 %v261
    %362 = vmatprep.subr.mxu0 %v260
    %363 = vmatpush1.msra.mxu0 %v259
    %364 = vmatprep.subr.mxu0 0.0
    %365 = vmatpush2.msra.mxu0 0.0
    %366 = vmatprep.subr.mxu0 0.0
    %367 = vmatpush2.msra.mxu0 0.0
    %368 = vmatprep.subr.mxu0 0.0
    %369 = vmatpush2.msra.mxu0 0.0
    %370 = vmatprep.subr.mxu0 0.0
    %371 = vmatpush2.msra.mxu0 0.0
    %372 = vmatprep.subr.mxu0 0.0
    %373 = vmatpush2.msra.mxu0 0.0
    %374 = vmatprep.subr.mxu0 0.0
    %375 = vmatpush2.msra.mxu0 0.0
    %376 = vmatprep.subr.mxu0 0.0
    %377 = vmatpush2.msra.mxu0 0.0
    %378 = vmatprep.subr.mxu0 %v330
    %379 = vmatpush2.msra.mxu0 %v327
    %380 = vmatprep.subr.mxu0 %v306
    %381 = vmatpush2.msra.mxu0 %v305
    %382 = vmatprep.subr.mxu0 %v304
    %383 = vmatpush2.msra.mxu0 %v303
    %384 = vmatprep.subr.mxu0 %v302
    %385 = vmatpush2.msra.mxu0 %v301
    %386 = vmatprep.subr.mxu0 %v300
    %387 = vmatpush2.msra.mxu0 %v299
    %388 = vmatprep.subr.mxu0 %v298
    %389 = vmatpush2.msra.mxu0 %v297
    %390 = vmatprep.subr.mxu0 %v296
    %391 = vmatpush2.msra.mxu0 %v295
    %392 = vmatprep.subr.mxu0 %v294
    %393 = vmatpush2.msra.mxu0 %v293
    %394 = vmatprep.subr.mxu0 %v292
    %395 = vmatpush2.msra.mxu0 %v291
    %396 = vmatprep.mubr.f32.mxu0 %v323
    %397 = vmatmul.mubr.f32.gmra.mxu0 %v257
    %v398 = vpop.f32.mrf.mxu0
    %v399 = vadd.f32 %v314, %v398
    %v400 = vpop.f32.mrf.mxu0
    %v401 = vadd.f32 %v318, %v400
    %402 = vdwg.mxu0
    %v403 = vmul.f32 %v399, 0.5
    %v404 = vmul.f32 %v401, 0.5
    %v405 = vtanh.pop %v403
    %v406 = vtanh.pop %v404
    %v407 = vmul.f32 %v405, 0.5
    %v408 = vmul.f32 %v406, 0.5
    %v409 = vadd.f32 %v407, 0.5
    %v410 = vadd.f32 %v408, 0.5
    %v413 = vcombine.low %v409, %v410
    %v415 = vunpack.c.l.s4 1983009808
    %v416 = vunpack.c.0.s8 %v415
    %v417 = vlaneseq
    %v418 = vshrl.u32 %v417, 7
    %v419 = vsub.s32 %v416, %v418
    %v420 = vrot.slane %v413, %v419
    %422 = vst [vmem:[#allocation10] sm:$0xf] %v420
    // Predicated region
    $region46: #{tpu_custom_call.1} parent=1 // pred_check
      _
    $region47: #{tpu_custom_call.1} parent=1 // pred_check_branch
      %424 = sbr.rel (0) target = $region49
    $region48: #{tpu_custom_call.1} parent=1 // pred_region
      %s426 = ssub.s32 64, 64
      %427 = vsyncadd [#allocation4], %s426
      %s429 = sshll.u32 [#allocation10], 4
      %s430 = int_to_ptr.vmem [resolvable:$true] %s429
      %432 = dma.vmem_to_hbm [thread:$0]  %s430, 64, %s7, [#allocation4]
    $region49: #{tpu_custom_call.1} parent=1 // pred_fallthru
      _
    // Predicated region
    $region50: #{tpu_custom_call.1} parent=1 // pred_check
      _
    $region51: #{tpu_custom_call.1} parent=1 // pred_check_branch
      %434 = sbr.rel (0) target = $region53
    $region52: #{tpu_custom_call.1} parent=1 // pred_region
      %435 = dma.done [#allocation4], 64
    $region53: #{tpu_custom_call.1} parent=1 // pred_fallthru
      _
    %436 = vsyncpa [#allocation3], 1
    %437 = vsyncpa [#allocation6], 1
    %438 = vsyncpa [#allocation9], 1
    %439 = vsyncpa [#allocation4], 1

</llo_original>
